<compile_context>
chip_gen: v7x
topology: tpu7x:2x2x1
jax: 0.10.0
libtpu: 0.0.40
codegen_flags: <defaults>
</compile_context>

<pallas_src>
import math

import jax
import jax.numpy as jnp
from jax import lax
from jax.experimental import pallas as pl
from jax.experimental.pallas import tpu as pltpu

VMEM_SPEC = pl.BlockSpec(memory_space=pltpu.MemorySpace.VMEM)


# ----------------------------------------------------------------- parameter packing

def pack_params(named_params):
    """Pack named 2-D f32 params into one (R, lane) buffer.

    Each block is padded to a multiple of 8 rows and the buffer lane width is the
    max column count rounded up to 128, so every in-kernel slice is a static,
    tile-aligned load and the whole set travels HBM->VMEM as one DMA.
    Returns (packed_buffer, offsets) with offsets[name] = (row_offset, rows, cols).
    """
    # TODO(synk): for hidden_dim >= 64 some tail params reach 4H > 128 columns; split
    # those into row-stacked 128-column chunks instead of widening the whole buffer.
    lane = 128
    max_c = max(int(a.shape[1]) for _, a in named_params)
    lane = max(lane, ((max_c + 127) // 128) * 128)
    offsets = {}
    blocks = []
    row = 0
    for name, a in named_params:
        r, c = int(a.shape[0]), int(a.shape[1])
        r_pad = ((r + 7) // 8) * 8
        blk = jnp.zeros((r_pad, lane), jnp.float32).at[:r, :c].set(a.astype(jnp.float32))
        blocks.append(blk)
        offsets[name] = (row, r, c)
        row += r_pad
    return jnp.concatenate(blocks, axis=0), offsets


def init_params(key, input_dim, hidden_dim):
    H = hidden_dim
    keys = iter(jax.random.split(key, 64))
    gin, tail = [], []

    def add_linear(lst, name_w, name_b, in_dim, out_dim, scale=0.05):
        kw, kb = jax.random.split(next(keys))
        lst.append((name_w, jax.random.normal(kw, (in_dim, out_dim), jnp.float32) * scale))
        lst.append((name_b, jax.random.normal(kb, (1, out_dim), jnp.float32) * scale))

    # GIN MLPs (Lin-ReLU-Lin), feature view and structure view
    add_linear(gin, "gf_w1", "gf_b1", input_dim, H)
    add_linear(gin, "gf_w2", "gf_b2", H, H)
    add_linear(gin, "gs_w1", "gs_b1", input_dim, H)
    add_linear(gin, "gs_w2", "gs_b2", H, H)

    # SimplifiedTransformer, one per view
    for v in ("tf_", "ts_"):
        add_linear(tail, v + "pw1", v + "pb1", H, 2 * H)   # projection MLP
        add_linear(tail, v + "pw2", v + "pb2", 2 * H, H)
        add_linear(tail, v + "rw1", v + "rb1", H, 2 * H)   # residual MLP
        add_linear(tail, v + "rw2", v + "rb2", 2 * H, H)
        add_linear(tail, v + "a1w", v + "a1b", H, 3 * H)   # self_attn in_proj (fused QKV)
        add_linear(tail, v + "a1ow", v + "a1ob", H, H)     # self_attn out_proj
        add_linear(tail, v + "a2w", v + "a2b", H, 3 * H)   # inter_graph_attn in_proj
        add_linear(tail, v + "a2ow", v + "a2ob", H, H)     # inter_graph_attn out_proj
        add_linear(tail, v + "fw1", v + "fb1", H, 4 * H)   # ffn
        add_linear(tail, v + "fw2", v + "fb2", 4 * H, H)
        for i in (1, 2, 3):                                # LayerNorm gamma / beta
            tail.append((v + f"g{i}", jnp.ones((1, H), jnp.float32)))
            tail.append((v + f"be{i}", jnp.zeros((1, H), jnp.float32)))

    # CrossViewAttention
    add_linear(tail, "c_wq", "c_bq", H, H)
    add_linear(tail, "c_wk", "c_bk", H, H)
    add_linear(tail, "c_wv", "c_bv", H, H)
    kw, kb = jax.random.split(next(keys))
    wco = jax.random.normal(kw, (2 * H, H), jnp.float32) * 0.05
    # split the (2H, H) co-occurrence weight: cat([xf, xs]) @ W == xf@W[:H] + xs@W[H:]
    tail.append(("c_wco_a", wco[:H]))
    tail.append(("c_wco_b", wco[H:]))
    tail.append(("c_bco", jax.random.normal(kb, (1, H), jnp.float32) * 0.05))
    return gin, tail


# --------------------------------------------- kernel A: gridded GIN + partial pool

def make_gin_pool_kernel(offsets, hidden_dim):
    H = hidden_dim

    def kernel(adjTf_ref, adjTs_ref, xf_agg_ref, x_agg_ref,
               xf_blk_ref, x_blk_ref, pmatT_ref, p_ref,
               nodes_ref, pool_ref):

        def w(name):
            off, r, c = offsets[name]
            return p_ref[off:off + r, :c]

        def mlp(x, p):  # Linear-ReLU-Linear (dropout = identity, eval mode)
            h = jnp.maximum(
                jnp.dot(x, w(p + "w1"), preferred_element_type=jnp.float32) + w(p + "b1"), 0.0)
            return jnp.dot(h, w(p + "w2"), preferred_element_type=jnp.float32) + w(p + "b2")

        # GINConv(eps=0): MLP(x_i + sum_{j->i} x_j). Adjacency arrives pre-transposed
        # and in bf16 (0/1 exact); features for the aggregation matmul are bf16 too,
        # accumulation is f32 via preferred_element_type.
        agg_f = jnp.dot(adjTf_ref[...], xf_agg_ref[...], preferred_element_type=jnp.float32)
        agg_s = jnp.dot(adjTs_ref[...], x_agg_ref[...], preferred_element_type=jnp.float32)

        h_f = mlp(xf_blk_ref[...] + agg_f, "gf_")          # (tm, H) f32
        h_s = mlp(x_blk_ref[...] + agg_s, "gs_")

        nodes_ref[:, :H] = h_f
        nodes_ref[:, H:] = h_s

        # partial global-mean-pool for this node block (mean scaling folded into pmatT)
        pm = pmatT_ref[...]                                 # (tm, B)
        pool_ref[0, :, :H] = lax.dot_general(
            pm, h_f, dimension_numbers=(((0,), (0,)), ((), ())),
            preferred_element_type=jnp.float32)
        pool_ref[0, :, H:] = lax.dot_general(
            pm, h_s, dimension_numbers=(((0,), (0,)), ((), ())),
            preferred_element_type=jnp.float32)

    return kernel


# --------------------------------------- kernel B: transformers + cross-view (tiny)

def make_tail_kernel(offsets, hidden_dim, num_heads):
    H = hidden_dim
    nh = num_heads
    hd = H // nh
    att_scale = 1.0 / math.sqrt(hd)
    inv_sqrt_h = 1.0 / math.sqrt(H)

    def kernel(pool_ref, p_ref, graphs_ref):

        def w(name):
            off, r, c = offsets[name]
            return p_ref[off:off + r, :c]

        def softmax(s):
            s = s - jnp.max(s, axis=-1, keepdims=True)
            e = jnp.exp(s)
            return e * pl.reciprocal(jnp.sum(e, axis=-1, keepdims=True), approx=True)

        def linear(x, wname, bname):
            return jnp.dot(x, w(wname), preferred_element_type=jnp.float32) + w(bname)

        def mlp(x, p):
            h = jnp.maximum(linear(x, p + "w1", p + "b1"), 0.0)
            return linear(h, p + "w2", p + "b2")

        def ln(x, g, b):
            mu = jnp.mean(x, axis=-1, keepdims=True)
            xc = x - mu
            var = jnp.mean(xc * xc, axis=-1, keepdims=True)
            return xc * lax.rsqrt(var + 1e-5) * g + b

        def mha(x, p):
            # nn.MultiheadAttention on an unbatched (B, H) sequence.
            # One fused (B,H)x(H,3H) QKV matmul; per-head q/k/v are cheap lane slices
            # of the (B,3H) activation; per-head out-projection contributions are
            # accumulated (no lane concat of activations).
            qkv = jnp.dot(x, w(p + "w"), preferred_element_type=jnp.float32) + w(p + "b")
            off_ow = offsets[p + "ow"][0]
            out = w(p + "ob")                               # (1, H), broadcasts
            for h in range(nh):
                base = h * hd
                q = qkv[:, base:base + hd] * att_scale
                k = qkv[:, H + base:H + base + hd]
                v = qkv[:, 2 * H + base:2 * H + base + hd]
                s = lax.dot_general(q, k, dimension_numbers=(((1,), (1,)), ((), ())),
                                    preferred_element_type=jnp.float32)   # (B, B)
                a = softmax(s)
                o = jnp.dot(a, v, preferred_element_type=jnp.float32)      # (B, hd)
                wo = p_ref[off_ow + base:off_ow + base + hd, :H]
                out = out + jnp.dot(o, wo, preferred_element_type=jnp.float32)
            return out

        def transformer(x, p):
            proj = mlp(x, p + "p")
            res = mlp(proj, p + "r")
            out = ln(mha(proj, p + "a1") + res, w(p + "g1"), w(p + "be1"))
            out = ln(mha(out, p + "a2") + out, w(p + "g2"), w(p + "be2"))
            out = ln(mlp(out, p + "f") + out, w(p + "g3"), w(p + "be3"))
            return out

        # reduce per-block partial pools -> global mean pool (B, 2H)
        pooled = jnp.sum(pool_ref[...], axis=0)
        hf_g = pooled[:, :H]
        hs_g = pooled[:, H:]

        hf_t = transformer(hf_g, "tf_")
        hs_t = transformer(hs_g, "ts_")

        # CrossViewAttention
        co = jnp.maximum(
            jnp.dot(hf_t, w("c_wco_a"), preferred_element_type=jnp.float32)
            + jnp.dot(hs_t, w("c_wco_b"), preferred_element_type=jnp.float32)
            + w("c_bco"), 0.0)

        def attend(xq, xk, xv):
            q = linear(xq, "c_wq", "c_bq")
            k = linear(xk, "c_wk", "c_bk")
            v = linear(xv, "c_wv", "c_bv")
            s = lax.dot_general(q, k, dimension_numbers=(((1,), (1,)), ((), ())),
                                preferred_element_type=jnp.float32)
            # Reference applies softmax first, then F.normalize(p=1) (exact no-op on
            # softmax rows), then divides by sqrt(H): post-softmax scale is correct.
            a = softmax(s) * inv_sqrt_h
            return jnp.dot(a, v, preferred_element_type=jnp.float32)

        hf_final = attend(hf_t, hs_t, hf_t) + co
        hs_final = attend(hs_t, hf_t, hs_t) + co

        graphs_ref[:, :H] = hf_final
        graphs_ref[:, H:] = hs_final

    return kernel


# ----------------------------------------------------------------------------- forward

def cvtgad_forward(packed_gin, off_gin, packed_tail, off_tail, x, adj, batch,
                   num_graphs, key, hidden_dim, num_heads=4, tm=None):
    N, Din = x.shape
    H = hidden_dim
    B = num_graphs

    if tm is None:
        tm = N
        for cand in (512, 256, 128, 64, 32, 16, 8):
            if cand <= N and N % cand == 0:
                tm = cand
                break
    assert N % tm == 0 and tm % 8 == 0
    nb = N // tm

    k1, k2, k3 = jax.random.split(key, 3)

    # feature-view augmentation (plain-JAX glue, deterministic keys)
    feat_mask = jax.random.bernoulli(k1, 0.1, x.shape)
    noise = jax.random.normal(k2, x.shape, x.dtype) * 0.1
    x_f = jnp.where(feat_mask, x + noise, x)

    # structure-view augmentation: flip 10% of dense-adjacency entries (as reference)
    edge_mask = jax.random.bernoulli(k3, 0.1, adj.shape)
    adj_s = jnp.where(edge_mask, 1.0 - adj, adj)

    # pre-transpose adjacencies (in-edge aggregation adj^T @ x) and cast to bf16
    # (entries are exactly 0/1 -> lossless; halves DMA bytes + VMEM, native MXU dtype)
    adjT_f = adj.T.astype(jnp.bfloat16)
    adjT_s = adj_s.T.astype(jnp.bfloat16)
    xf_agg = x_f.astype(jnp.bfloat16)
    x_agg = x.astype(jnp.bfloat16)

    # mean pooling matrix with the 1/count fold-in (exact divide, done once host-side)
    pmat = (batch[None, :] == jnp.arange(num_graphs)[:, None]).astype(jnp.float32)
    counts = jnp.maximum(jnp.sum(pmat, axis=1, keepdims=True), 1.0)
    pmatT = (pmat / counts).T                      # (N, B)

    # ---- kernel A: gridded GIN + partial pool -------------------------------------
    est_a = (2 * 2 * tm * N * 2            # 2 adjT blocks, double-buffered, bf16
             + 2 * 2 * N * Din * 2         # full bf16 feature arrays
             + 2 * 2 * tm * Din * 4        # f32 feature blocks
             + 2 * tm * B * 4              # pmatT block
             + 2 * int(packed_gin.size) * 4
             + 2 * tm * 2 * H * 4          # nodes output block
             + 2 * B * 2 * H * 4)          # pool output block
    vmem_a = int(min(max(2 * est_a + (8 << 20), 32 << 20), 56 << 20))  # safe on v5e/v6e/v7x

    flops_a = 4 * N * N * Din + 4 * N * H * (Din + H) + 8 * N * B * H
    bytes_a = (2 * N * N * 2 + 4 * N * Din * 2 + 2 * N * Din * 4 + N * B * 4
               + int(packed_gin.size) * 4 + N * 2 * H * 4 + nb * B * 2 * H * 4)

    kernel_a = make_gin_pool_kernel(off_gin, H)
    nodes, pool_partial = pl.pallas_call(
        kernel_a,
        out_shape=(jax.ShapeDtypeStruct((N, 2 * H), jnp.float32),
                   jax.ShapeDtypeStruct((nb, B, 2 * H), jnp.float32)),
        grid=(nb,),
        in_specs=[
            pl.BlockSpec((tm, N), lambda i: (i, 0)),            # adjT_f block (bf16)
            pl.BlockSpec((tm, N), lambda i: (i, 0)),            # adjT_s block (bf16)
            pl.BlockSpec((N, Din), lambda i: (0, 0)),           # x_f full (bf16, agg RHS)
            pl.BlockSpec((N, Din), lambda i: (0, 0)),           # x   full (bf16, agg RHS)
            pl.BlockSpec((tm, Din), lambda i: (i, 0)),          # x_f block (f32 residual)
            pl.BlockSpec((tm, Din), lambda i: (i, 0)),          # x   block (f32 residual)
            pl.BlockSpec((tm, B), lambda i: (i, 0)),            # pmatT block
            pl.BlockSpec(packed_gin.shape, lambda i: (0, 0)),   # GIN params
        ],
        out_specs=(pl.BlockSpec((tm, 2 * H), lambda i: (i, 0)),
                   pl.BlockSpec((1, B, 2 * H), lambda i: (i, 0, 0))),
        compiler_params=pltpu.CompilerParams(
            dimension_semantics=("parallel",), vmem_limit_bytes=vmem_a),
        cost_estimate=pl.CostEstimate(flops=int(flops_a), transcendentals=0,
                                      bytes_accessed=int(bytes_a)),
    )(adjT_f, adjT_s, xf_agg, x_agg, x_f, x, pmatT, packed_gin)

    # ---- kernel B: transformers + cross-view (tiny, single invocation) -------------
    kernel_b = make_tail_kernel(off_tail, H, num_heads)
    graphs = pl.pallas_call(
        kernel_b,
        out_shape=jax.ShapeDtypeStruct((B, 2 * H), jnp.float32),
        in_specs=[VMEM_SPEC, VMEM_SPEC],
        out_specs=VMEM_SPEC,
        compiler_params=pltpu.CompilerParams(vmem_limit_bytes=32 << 20),
    )(pool_partial, packed_tail)

    h_f = nodes[:, :H]
    h_s = nodes[:, H:]
    h_f_final = graphs[:, :H]
    h_s_final = graphs[:, H:]
    return h_f_final, h_s_final, h_f, h_s


# -------------------------------------------------------------------------------- main

if __name__ == "__main__":
    key = jax.random.PRNGKey(0)
    N, input_dim, hidden_dim, B = 16, 8, 32, 4  # 4 graphs x 4 nodes
    kx, ka, kp, kaug = jax.random.split(key, 4)

    x = jax.random.normal(kx, (N, input_dim), jnp.float32)
    adj = (jax.random.uniform(ka, (N, N)) < 0.3).astype(jnp.float32)
    adj = jnp.maximum(adj, adj.T) * (1.0 - jnp.eye(N, dtype=jnp.float32))
    batch = jnp.repeat(jnp.arange(B, dtype=jnp.int32), N // B)

    gin_named, tail_named = init_params(kp, input_dim, hidden_dim)
    packed_gin, off_gin = pack_params(gin_named)
    packed_tail, off_tail = pack_params(tail_named)

    # tm=8 -> a 2-step node-block grid even at this toy size (exercises the pipeline)
    outs = cvtgad_forward(packed_gin, off_gin, packed_tail, off_tail, x, adj, batch,
                          B, kaug, hidden_dim, num_heads=4, tm=8)
    outs = jax.block_until_ready(outs)

    expected_shapes = [(B, hidden_dim), (B, hidden_dim), (N, hidden_dim), (N, hidden_dim)]
    assert [tuple(o.shape) for o in outs] == expected_shapes
    assert all(bool(jnp.all(jnp.isfinite(o))) for o in outs)
    print("KERNEL_OK")
</pallas_src>

<mosaic_0001>
module attributes {stable_mosaic.version = 11 : i64} {
  func.func @kernel(%arg0: i32, %arg1: memref<8x16xbf16, #tpu.memory_space<vmem>>, %arg2: memref<8x16xbf16, #tpu.memory_space<vmem>>, %arg3: memref<16x8xbf16, #tpu.memory_space<vmem>>, %arg4: memref<16x8xbf16, #tpu.memory_space<vmem>>, %arg5: memref<8x8xf32, #tpu.memory_space<vmem>>, %arg6: memref<8x8xf32, #tpu.memory_space<vmem>>, %arg7: memref<8x4xf32, #tpu.memory_space<vmem>>, %arg8: memref<112x128xf32, #tpu.memory_space<vmem>>, %arg9: memref<8x64xf32, #tpu.memory_space<vmem>>, %arg10: memref<1x4x64xf32, #tpu.memory_space<vmem>>) attributes {dimension_semantics = [#tpu.dimension_semantics<parallel>], iteration_bounds = array<i64: 2>, scalar_prefetch = 0 : i64, scratch_operands = 0 : i64, tpu.core_type = #tpu.core_type<tc>, window_params = [{transform_indices = @transform_0, window_bounds = array<i64: 8, 16>}, {transform_indices = @transform_1, window_bounds = array<i64: 8, 16>}, {pipeline_mode = #tpu.pipeline_mode<synchronous>, transform_indices = @transform_2, window_bounds = array<i64: 16, 8>}, {pipeline_mode = #tpu.pipeline_mode<synchronous>, transform_indices = @transform_3, window_bounds = array<i64: 16, 8>}, {transform_indices = @transform_4, window_bounds = array<i64: 8, 8>}, {transform_indices = @transform_5, window_bounds = array<i64: 8, 8>}, {transform_indices = @transform_6, window_bounds = array<i64: 8, 4>}, {pipeline_mode = #tpu.pipeline_mode<synchronous>, transform_indices = @transform_7, window_bounds = array<i64: 112, 128>}, {transform_indices = @transform_8, window_bounds = array<i64: 8, 64>}, {transform_indices = @transform_9, window_bounds = array<i64: 1, 4, 64>}]} {
    %c0 = arith.constant 0 : index
    %c0_0 = arith.constant 0 : index
    %0 = vector.load %arg1[%c0, %c0_0] : memref<8x16xbf16, #tpu.memory_space<vmem>>, vector<8x16xbf16>
    %c0_1 = arith.constant 0 : index
    %c0_2 = arith.constant 0 : index
    %1 = vector.load %arg3[%c0_1, %c0_2] : memref<16x8xbf16, #tpu.memory_space<vmem>>, vector<16x8xbf16>
    %cst = arith.constant dense<0.000000e+00> : vector<8x8xf32>
    %2 = tpu.matmul %0, %1, %cst {dimension_numbers = #tpu.dot_dimension_numbers<[1], [0], [0], [1], [0, 0, 1, 1], [], []>} : vector<8x16xbf16>, vector<16x8xbf16>, vector<8x8xf32> -> vector<8x8xf32>
    %c0_3 = arith.constant 0 : index
    %c0_4 = arith.constant 0 : index
    %3 = vector.load %arg2[%c0_3, %c0_4] : memref<8x16xbf16, #tpu.memory_space<vmem>>, vector<8x16xbf16>
    %c0_5 = arith.constant 0 : index
    %c0_6 = arith.constant 0 : index
    %4 = vector.load %arg4[%c0_5, %c0_6] : memref<16x8xbf16, #tpu.memory_space<vmem>>, vector<16x8xbf16>
    %cst_7 = arith.constant dense<0.000000e+00> : vector<8x8xf32>
    %5 = tpu.matmul %3, %4, %cst_7 {dimension_numbers = #tpu.dot_dimension_numbers<[1], [0], [0], [1], [0, 0, 1, 1], [], []>} : vector<8x16xbf16>, vector<16x8xbf16>, vector<8x8xf32> -> vector<8x8xf32>
    %c0_8 = arith.constant 0 : index
    %c0_9 = arith.constant 0 : index
    %6 = vector.load %arg5[%c0_8, %c0_9] : memref<8x8xf32, #tpu.memory_space<vmem>>, vector<8x8xf32>
    %7 = arith.addf %6, %2 : vector<8x8xf32>
    %c0_10 = arith.constant 0 : index
    %c0_11 = arith.constant 0 : index
    %8 = vector.load %arg8[%c0_10, %c0_11] : memref<112x128xf32, #tpu.memory_space<vmem>>, vector<8x32xf32>
    %cst_12 = arith.constant dense<0.000000e+00> : vector<8x32xf32>
    %9 = tpu.matmul %7, %8, %cst_12 {dimension_numbers = #tpu.dot_dimension_numbers<[1], [0], [0], [1], [0, 0, 1, 1], [], []>} : vector<8x8xf32>, vector<8x32xf32>, vector<8x32xf32> -> vector<8x32xf32>
    %c8 = arith.constant 8 : index
    %c0_13 = arith.constant 0 : index
    %10 = vector.load %arg8[%c8, %c0_13] : memref<112x128xf32, #tpu.memory_space<vmem>>, vector<1x32xf32>
    %11 = vector.broadcast %10 : vector<1x32xf32> to vector<8x32xf32>
    %12 = arith.addf %9, %11 : vector<8x32xf32>
    %cst_14 = arith.constant 0.000000e+00 : f32
    %13 = vector.broadcast %cst_14 : f32 to vector<8x32xf32>
    %14 = arith.maximumf %12, %13 : vector<8x32xf32>
    %c16 = arith.constant 16 : index
    %c0_15 = arith.constant 0 : index
    %15 = vector.load %arg8[%c16, %c0_15] : memref<112x128xf32, #tpu.memory_space<vmem>>, vector<32x32xf32>
    %cst_16 = arith.constant dense<0.000000e+00> : vector<8x32xf32>
    %16 = tpu.matmul %14, %15, %cst_16 {dimension_numbers = #tpu.dot_dimension_numbers<[1], [0], [0], [1], [0, 0, 1, 1], [], []>} : vector<8x32xf32>, vector<32x32xf32>, vector<8x32xf32> -> vector<8x32xf32>
    %c48 = arith.constant 48 : index
    %c0_17 = arith.constant 0 : index
    %17 = vector.load %arg8[%c48, %c0_17] : memref<112x128xf32, #tpu.memory_space<vmem>>, vector<1x32xf32>
    %18 = vector.broadcast %17 : vector<1x32xf32> to vector<8x32xf32>
    %19 = arith.addf %16, %18 : vector<8x32xf32>
    %c0_18 = arith.constant 0 : index
    %c0_19 = arith.constant 0 : index
    %20 = vector.load %arg6[%c0_18, %c0_19] : memref<8x8xf32, #tpu.memory_space<vmem>>, vector<8x8xf32>
    %21 = arith.addf %20, %5 : vector<8x8xf32>
    %c56 = arith.constant 56 : index
    %c0_20 = arith.constant 0 : index
    %22 = vector.load %arg8[%c56, %c0_20] : memref<112x128xf32, #tpu.memory_space<vmem>>, vector<8x32xf32>
    %cst_21 = arith.constant dense<0.000000e+00> : vector<8x32xf32>
    %23 = tpu.matmul %21, %22, %cst_21 {dimension_numbers = #tpu.dot_dimension_numbers<[1], [0], [0], [1], [0, 0, 1, 1], [], []>} : vector<8x8xf32>, vector<8x32xf32>, vector<8x32xf32> -> vector<8x32xf32>
    %c64 = arith.constant 64 : index
    %c0_22 = arith.constant 0 : index
    %24 = vector.load %arg8[%c64, %c0_22] : memref<112x128xf32, #tpu.memory_space<vmem>>, vector<1x32xf32>
    %25 = vector.broadcast %24 : vector<1x32xf32> to vector<8x32xf32>
    %26 = arith.addf %23, %25 : vector<8x32xf32>
    %cst_23 = arith.constant 0.000000e+00 : f32
    %27 = vector.broadcast %cst_23 : f32 to vector<8x32xf32>
    %28 = arith.maximumf %26, %27 : vector<8x32xf32>
    %c72 = arith.constant 72 : index
    %c0_24 = arith.constant 0 : index
    %29 = vector.load %arg8[%c72, %c0_24] : memref<112x128xf32, #tpu.memory_space<vmem>>, vector<32x32xf32>
    %cst_25 = arith.constant dense<0.000000e+00> : vector<8x32xf32>
    %30 = tpu.matmul %28, %29, %cst_25 {dimension_numbers = #tpu.dot_dimension_numbers<[1], [0], [0], [1], [0, 0, 1, 1], [], []>} : vector<8x32xf32>, vector<32x32xf32>, vector<8x32xf32> -> vector<8x32xf32>
    %c104 = arith.constant 104 : index
    %c0_26 = arith.constant 0 : index
    %31 = vector.load %arg8[%c104, %c0_26] : memref<112x128xf32, #tpu.memory_space<vmem>>, vector<1x32xf32>
    %32 = vector.broadcast %31 : vector<1x32xf32> to vector<8x32xf32>
    %33 = arith.addf %30, %32 : vector<8x32xf32>
    %c0_27 = arith.constant 0 : index
    %c0_28 = arith.constant 0 : index
    %34 = vector.load %arg9[%c0_27, %c0_28] : memref<8x64xf32, #tpu.memory_space<vmem>>, vector<8x32xf32>
    tpu.vector_store %arg9[%c0_27, %c0_28], %19 {strides = array<i32>} : memref<8x64xf32, #tpu.memory_space<vmem>>, vector<8x32xf32>,
    %c0_29 = arith.constant 0 : index
    %c32 = arith.constant 32 : index
    %35 = vector.load %arg9[%c0_29, %c32] : memref<8x64xf32, #tpu.memory_space<vmem>>, vector<8x32xf32>
    tpu.vector_store %arg9[%c0_29, %c32], %33 {strides = array<i32>} : memref<8x64xf32, #tpu.memory_space<vmem>>, vector<8x32xf32>,
    %c0_30 = arith.constant 0 : index
    %c0_31 = arith.constant 0 : index
    %36 = vector.load %arg7[%c0_30, %c0_31] : memref<8x4xf32, #tpu.memory_space<vmem>>, vector<8x4xf32>
    %cst_32 = arith.constant dense<0.000000e+00> : vector<4x32xf32>
    %37 = tpu.matmul %36, %19, %cst_32 {dimension_numbers = #tpu.dot_dimension_numbers<[0], [0], [1], [1], [0, 1, 1, 1], [], []>} : vector<8x4xf32>, vector<8x32xf32>, vector<4x32xf32> -> vector<4x32xf32>
    %c0_33 = arith.constant 0 : index
    %c0_34 = arith.constant 0 : index
    %c0_35 = arith.constant 0 : index
    %38 = vector.load %arg10[%c0_33, %c0_34, %c0_35] : memref<1x4x64xf32, #tpu.memory_space<vmem>>, vector<1x4x32xf32>
    %39 = vector.shape_cast %38 : vector<1x4x32xf32> to vector<4x32xf32>
    %40 = vector.shape_cast %37 : vector<4x32xf32> to vector<1x4x32xf32>
    tpu.vector_store %arg10[%c0_33, %c0_34, %c0_35], %40 {strides = array<i32>} : memref<1x4x64xf32, #tpu.memory_space<vmem>>, vector<1x4x32xf32>,
    %cst_36 = arith.constant dense<0.000000e+00> : vector<4x32xf32>
    %41 = tpu.matmul %36, %33, %cst_36 {dimension_numbers = #tpu.dot_dimension_numbers<[0], [0], [1], [1], [0, 1, 1, 1], [], []>} : vector<8x4xf32>, vector<8x32xf32>, vector<4x32xf32> -> vector<4x32xf32>
    %c0_37 = arith.constant 0 : index
    %c0_38 = arith.constant 0 : index
    %c32_39 = arith.constant 32 : index
    %42 = vector.load %arg10[%c0_37, %c0_38, %c32_39] : memref<1x4x64xf32, #tpu.memory_space<vmem>>, vector<1x4x32xf32>
    %43 = vector.shape_cast %42 : vector<1x4x32xf32> to vector<4x32xf32>
    %44 = vector.shape_cast %41 : vector<4x32xf32> to vector<1x4x32xf32>
    tpu.vector_store %arg10[%c0_37, %c0_38, %c32_39], %44 {strides = array<i32>} : memref<1x4x64xf32, #tpu.memory_space<vmem>>, vector<1x4x32xf32>,
    return
  }
  func.func @transform_0(%arg0: i32) -> (i32, i32) {
    %c0_i32 = arith.constant 0 : i32
    %c0_i32_0 = arith.constant 0 : i32
    return %arg0, %c0_i32 : i32, i32
  }
  func.func @transform_1(%arg0: i32) -> (i32, i32) {
    %c0_i32 = arith.constant 0 : i32
    %c0_i32_0 = arith.constant 0 : i32
    return %arg0, %c0_i32 : i32, i32
  }
  func.func @transform_2(%arg0: i32) -> (i32, i32) {
    %c0_i32 = arith.constant 0 : i32
    %c0_i32_0 = arith.constant 0 : i32
    %c0_i32_1 = arith.constant 0 : i32
    return %c0_i32, %c0_i32_0 : i32, i32
  }
  func.func @transform_3(%arg0: i32) -> (i32, i32) {
    %c0_i32 = arith.constant 0 : i32
    %c0_i32_0 = arith.constant 0 : i32
    %c0_i32_1 = arith.constant 0 : i32
    return %c0_i32, %c0_i32_0 : i32, i32
  }
  func.func @transform_4(%arg0: i32) -> (i32, i32) {
    %c0_i32 = arith.constant 0 : i32
    %c0_i32_0 = arith.constant 0 : i32
    return %arg0, %c0_i32 : i32, i32
  }
  func.func @transform_5(%arg0: i32) -> (i32, i32) {
    %c0_i32 = arith.constant 0 : i32
    %c0_i32_0 = arith.constant 0 : i32
    return %arg0, %c0_i32 : i32, i32
  }
  func.func @transform_6(%arg0: i32) -> (i32, i32) {
    %c0_i32 = arith.constant 0 : i32
    %c0_i32_0 = arith.constant 0 : i32
    return %arg0, %c0_i32 : i32, i32
  }
  func.func @transform_7(%arg0: i32) -> (i32, i32) {
    %c0_i32 = arith.constant 0 : i32
    %c0_i32_0 = arith.constant 0 : i32
    %c0_i32_1 = arith.constant 0 : i32
    return %c0_i32, %c0_i32_0 : i32, i32
  }
  func.func @transform_8(%arg0: i32) -> (i32, i32) {
    %c0_i32 = arith.constant 0 : i32
    %c0_i32_0 = arith.constant 0 : i32
    return %arg0, %c0_i32 : i32, i32
  }
  func.func @transform_9(%arg0: i32) -> (i32, i32, i32) {
    %c0_i32 = arith.constant 0 : i32
    %c0_i32_0 = arith.constant 0 : i32
    %c0_i32_1 = arith.constant 0 : i32
    return %arg0, %c0_i32, %c0_i32_0 : i32, i32, i32
  }
}

</mosaic_0001>

<llo_original>
// kernel: tpu_custom_call.1
$region0: #{tpu_custom_call.1}
  #allocation0 [shape = 'u32[]', space=smem, size = 0x4, offset = 0x4, fixed_abs, tag = 'smem constant byte address 0x4 - core index']
  #allocation1 [shape = 'u32[144,128]{1,0:T(1,128)}', space=vmem, size = 0x12000, scoped, tag = 'internal scratch']
  %s0 = inlined_call_operand.hbm [shape: bf16[16,16], index: 0, kind: input, shape index: {}]
  %s1 = inlined_call_operand.hbm [shape: bf16[16,16], index: 1, kind: input, shape index: {}]
  %s2 = inlined_call_operand.vmem [shape: bf16[16,8], index: 2, kind: input, shape index: {}]
  %s3 = inlined_call_operand.vmem [shape: bf16[16,8], index: 3, kind: input, shape index: {}]
  %s4 = inlined_call_operand.vmem [shape: f32[16,8], index: 4, kind: input, shape index: {}]
  %s5 = inlined_call_operand.vmem [shape: f32[16,8], index: 5, kind: input, shape index: {}]
  %s6 = inlined_call_operand.vmem [shape: f32[16,4], index: 6, kind: input, shape index: {}]
  %s7 = inlined_call_operand.vmem [shape: f32[112,128], index: 7, kind: input, shape index: {}]
  %s8 = inlined_call_operand.hbm [shape: f32[16,64], index: 8, kind: output, shape index: {0}]
  %s9 = inlined_call_operand.hbm [shape: f32[2,4,64], index: 9, kind: output, shape index: {1}]
  %10 = xla_tuple %s8, %s9
  %s11 = sld [smem:[#allocation0]]
  $region81: #{tpu_custom_call.1} parent=0
    _
  %s13 = ssub.s32 1, %s11
  %s14 = scalar_select 0, %s13, %s11
  $region1: #{tpu_custom_call.1} parent=0
    #allocation2 [shape = 'u8[4096]{0}', space=vmem, size = 0x1000, scoped, tag = 'input window, operand 0']
    #allocation3 [shape = 's32[2]{0}', space=sflag, size = 0x8, scoped, tag = 'scoped memory for tpu_custom_call.1']
    #allocation4 [shape = 's32[2]{0}', space=sflag, size = 0x8, scoped, tag = 'scoped memory for tpu_custom_call.1']
    #allocation5 [shape = 'u8[4096]{0}', space=vmem, size = 0x1000, scoped, tag = 'input window, operand 1']
    #allocation6 [shape = 's32[2]{0}', space=sflag, size = 0x8, scoped, tag = 'scoped memory for tpu_custom_call.1']
    #allocation7 [shape = 'u8[8192]{0}', space=vmem, size = 0x2000, scoped, tag = 'output window, operand 0']
    #allocation8 [shape = 'u8[4096]{0}', space=vmem, size = 0x1000, scoped, tag = 'output window, operand 1']
    #allocation9 [shape = 's32[2]{0}', space=sflag, size = 0x8, scoped, tag = 'scoped memory for tpu_custom_call.1']
    %15 = vsyncpa [#allocation3], 0
    %s16 = scalar_lea.sflag [#allocation3], 1
    %17 = vsyncpa %s16, 0
    %18 = vsyncpa [#allocation6], 0
    %s19 = scalar_lea.sflag [#allocation6], 1
    %20 = vsyncpa %s19, 0
    %21 = vsyncpa [#allocation4], 0
    %s22 = scalar_lea.sflag [#allocation4], 1
    %23 = vsyncpa %s22, 0
    %24 = vsyncpa [#allocation9], 0
    %s25 = scalar_lea.sflag [#allocation9], 1
    %26 = vsyncpa %s25, 0
    loop: start=0, step=1, limit=4
    $region2: #{tpu_custom_call.1} parent=1 // loop_pre_header
      _
    $region3: #{tpu_custom_call.1} parent=1 // loop_header
      %s28 = sphi 0, %s32
      %p29 = scmp.ge.s32.totalorder %s28, 4
      %s38 = sphi 0, %s40
      %s41 = sphi 0, %s38
      %s42 = sphi 0, %s41
      %s58 = sphi 0, %s42
      %s64 = sphi 0, %s66
      %s67 = sphi 0, %s64
      %s68 = sphi 0, %s67
      %s84 = sphi 0, %s68
      %s88 = sphi 0, %s88
      %s90 = sphi 0, %s88
      %s91 = sphi 0, %s90
      %s105 = sphi 0, %s91
      %s109 = sphi 0, %s109
      %s111 = sphi 0, %s109
      %s112 = sphi 0, %s111
      %s126 = sphi 0, %s112
      %s132 = sphi 0, %s134
      %s135 = sphi 0, %s132
      %s136 = sphi 0, %s135
      %s152 = sphi 0, %s136
      %s158 = sphi 0, %s160
      %s161 = sphi 0, %s158
      %s162 = sphi 0, %s161
      %s178 = sphi 0, %s162
      %s184 = sphi 0, %s186
      %s187 = sphi 0, %s184
      %s188 = sphi 0, %s187
      %s204 = sphi 0, %s188
      %s208 = sphi 0, %s208
      %s210 = sphi 0, %s208
      %s211 = sphi 0, %s210
      %s225 = sphi 0, %s211
      %s231 = sphi 0, %s233
      %s234 = sphi 0, %s231
      %s235 = sphi 0, %s234
      %s251 = sphi 0, %s235
      %s257 = sphi 0, %s259
      %s260 = sphi 0, %s257
      %s261 = sphi 0, %s260
      %s277 = sphi 0, %s261
    $region4: #{tpu_custom_call.1} parent=1 // loop_header_branch
      %31 = sbr.rel (%p29) target = $region8
    $region5: #{tpu_custom_call.1} parent=1 // loop_body
      %s33 = ssub.s32 %s28, 1
      %s34 = ssub.s32 %s28, 2
      %s35 = sadd.s32 %s28, 1
      %s36 = ssub.s32 %s28, %s35
      %p37 = scmp.eq.s32.totalorder %s36, 0
      %s39 = sadd.s32 %s38, 1
      %s40 = scalar_select %p37, %s38, %s39
      %p43 = pneg %p37
      %p44 = scmp.eq.s32.totalorder %s28, 1
      %p45 = por %p43, %p44
      %p46 = scmp.ne.s32.totalorder %s38, %s41
      %p47 = scmp.eq.s32.totalorder %s28, 0
      %p48 = por %p46, %p47
      %p49 = scmp.ne.s32.totalorder %s38, %s41
      %p50 = scmp.eq.s32.totalorder %s33, 1
      %p51 = por %p49, %p50
      %p52 = scmp.ne.s32.totalorder %s41, %s42
      %p53 = scmp.eq.s32.totalorder %s33, 0
      %p54 = por %p52, %p53
      %p55 = scmp.ne.s32.totalorder %s41, %s42
      %p56 = scmp.eq.s32.totalorder %s34, 1
      %p57 = por %p55, %p56
      %p59 = scmp.ne.s32.totalorder %s42, %s58
      %p60 = scmp.eq.s32.totalorder %s34, 0
      %p61 = por %p59, %p60
      %s62 = ssub.s32 %s28, %s35
      %p63 = scmp.eq.s32.totalorder %s62, 0
      %s65 = sadd.s32 %s64, 1
      %s66 = scalar_select %p63, %s64, %s65
      %p69 = pneg %p63
      %p70 = scmp.eq.s32.totalorder %s28, 1
      %p71 = por %p69, %p70
      %p72 = scmp.ne.s32.totalorder %s64, %s67
      %p73 = scmp.eq.s32.totalorder %s28, 0
      %p74 = por %p72, %p73
      %p75 = scmp.ne.s32.totalorder %s64, %s67
      %p76 = scmp.eq.s32.totalorder %s33, 1
      %p77 = por %p75, %p76
      %p78 = scmp.ne.s32.totalorder %s67, %s68
      %p79 = scmp.eq.s32.totalorder %s33, 0
      %p80 = por %p78, %p79
      %p81 = scmp.ne.s32.totalorder %s67, %s68
      %p82 = scmp.eq.s32.totalorder %s34, 1
      %p83 = por %p81, %p82
      %p85 = scmp.ne.s32.totalorder %s68, %s84
      %p86 = scmp.eq.s32.totalorder %s34, 0
      %p87 = por %p85, %p86
      %s89 = sadd.s32 %s88, 1
      %p92 = scmp.eq.s32.totalorder %s28, 1
      %p93 = scmp.ne.s32.totalorder %s88, %s90
      %p94 = scmp.eq.s32.totalorder %s28, 0
      %p95 = por %p93, %p94
      %p96 = scmp.ne.s32.totalorder %s88, %s90
      %p97 = scmp.eq.s32.totalorder %s33, 1
      %p98 = por %p96, %p97
      %p99 = scmp.ne.s32.totalorder %s90, %s91
      %p100 = scmp.eq.s32.totalorder %s33, 0
      %p101 = por %p99, %p100
      %p102 = scmp.ne.s32.totalorder %s90, %s91
      %p103 = scmp.eq.s32.totalorder %s34, 1
      %p104 = por %p102, %p103
      %p106 = scmp.ne.s32.totalorder %s91, %s105
      %p107 = scmp.eq.s32.totalorder %s34, 0
      %p108 = por %p106, %p107
      %s110 = sadd.s32 %s109, 1
      %p113 = scmp.eq.s32.totalorder %s28, 1
      %p114 = scmp.ne.s32.totalorder %s109, %s111
      %p115 = scmp.eq.s32.totalorder %s28, 0
      %p116 = por %p114, %p115
      %p117 = scmp.ne.s32.totalorder %s109, %s111
      %p118 = scmp.eq.s32.totalorder %s33, 1
      %p119 = por %p117, %p118
      %p120 = scmp.ne.s32.totalorder %s111, %s112
      %p121 = scmp.eq.s32.totalorder %s33, 0
      %p122 = por %p120, %p121
      %p123 = scmp.ne.s32.totalorder %s111, %s112
      %p124 = scmp.eq.s32.totalorder %s34, 1
      %p125 = por %p123, %p124
      %p127 = scmp.ne.s32.totalorder %s112, %s126
      %p128 = scmp.eq.s32.totalorder %s34, 0
      %p129 = por %p127, %p128
      %s130 = ssub.s32 %s28, %s35
      %p131 = scmp.eq.s32.totalorder %s130, 0
      %s133 = sadd.s32 %s132, 1
      %s134 = scalar_select %p131, %s132, %s133
      %p137 = pneg %p131
      %p138 = scmp.eq.s32.totalorder %s28, 1
      %p139 = por %p137, %p138
      %p140 = scmp.ne.s32.totalorder %s132, %s135
      %p141 = scmp.eq.s32.totalorder %s28, 0
      %p142 = por %p140, %p141
      %p143 = scmp.ne.s32.totalorder %s132, %s135
      %p144 = scmp.eq.s32.totalorder %s33, 1
      %p145 = por %p143, %p144
      %p146 = scmp.ne.s32.totalorder %s135, %s136
      %p147 = scmp.eq.s32.totalorder %s33, 0
      %p148 = por %p146, %p147
      %p149 = scmp.ne.s32.totalorder %s135, %s136
      %p150 = scmp.eq.s32.totalorder %s34, 1
      %p151 = por %p149, %p150
      %p153 = scmp.ne.s32.totalorder %s136, %s152
      %p154 = scmp.eq.s32.totalorder %s34, 0
      %p155 = por %p153, %p154
      %s156 = ssub.s32 %s28, %s35
      %p157 = scmp.eq.s32.totalorder %s156, 0
      %s159 = sadd.s32 %s158, 1
      %s160 = scalar_select %p157, %s158, %s159
      %p163 = pneg %p157
      %p164 = scmp.eq.s32.totalorder %s28, 1
      %p165 = por %p163, %p164
      %p166 = scmp.ne.s32.totalorder %s158, %s161
      %p167 = scmp.eq.s32.totalorder %s28, 0
      %p168 = por %p166, %p167
      %p169 = scmp.ne.s32.totalorder %s158, %s161
      %p170 = scmp.eq.s32.totalorder %s33, 1
      %p171 = por %p169, %p170
      %p172 = scmp.ne.s32.totalorder %s161, %s162
      %p173 = scmp.eq.s32.totalorder %s33, 0
      %p174 = por %p172, %p173
      %p175 = scmp.ne.s32.totalorder %s161, %s162
      %p176 = scmp.eq.s32.totalorder %s34, 1
      %p177 = por %p175, %p176
      %p179 = scmp.ne.s32.totalorder %s162, %s178
      %p180 = scmp.eq.s32.totalorder %s34, 0
      %p181 = por %p179, %p180
      %s182 = ssub.s32 %s28, %s35
      %p183 = scmp.eq.s32.totalorder %s182, 0
      %s185 = sadd.s32 %s184, 1
      %s186 = scalar_select %p183, %s184, %s185
      %p189 = pneg %p183
      %p190 = scmp.eq.s32.totalorder %s28, 1
      %p191 = por %p189, %p190
      %p192 = scmp.ne.s32.totalorder %s184, %s187
      %p193 = scmp.eq.s32.totalorder %s28, 0
      %p194 = por %p192, %p193
      %p195 = scmp.ne.s32.totalorder %s184, %s187
      %p196 = scmp.eq.s32.totalorder %s33, 1
      %p197 = por %p195, %p196
      %p198 = scmp.ne.s32.totalorder %s187, %s188
      %p199 = scmp.eq.s32.totalorder %s33, 0
      %p200 = por %p198, %p199
      %p201 = scmp.ne.s32.totalorder %s187, %s188
      %p202 = scmp.eq.s32.totalorder %s34, 1
      %p203 = por %p201, %p202
      %p205 = scmp.ne.s32.totalorder %s188, %s204
      %p206 = scmp.eq.s32.totalorder %s34, 0
      %p207 = por %p205, %p206
      %s209 = sadd.s32 %s208, 1
      %p212 = scmp.eq.s32.totalorder %s28, 1
      %p213 = scmp.ne.s32.totalorder %s208, %s210
      %p214 = scmp.eq.s32.totalorder %s28, 0
      %p215 = por %p213, %p214
      %p216 = scmp.ne.s32.totalorder %s208, %s210
      %p217 = scmp.eq.s32.totalorder %s33, 1
      %p218 = por %p216, %p217
      %p219 = scmp.ne.s32.totalorder %s210, %s211
      %p220 = scmp.eq.s32.totalorder %s33, 0
      %p221 = por %p219, %p220
      %p222 = scmp.ne.s32.totalorder %s210, %s211
      %p223 = scmp.eq.s32.totalorder %s34, 1
      %p224 = por %p222, %p223
      %p226 = scmp.ne.s32.totalorder %s211, %s225
      %p227 = scmp.eq.s32.totalorder %s34, 0
      %p228 = por %p226, %p227
      %s229 = ssub.s32 %s28, %s35
      %p230 = scmp.eq.s32.totalorder %s229, 0
      %s232 = sadd.s32 %s231, 1
      %s233 = scalar_select %p230, %s231, %s232
      %p236 = pneg %p230
      %p237 = scmp.eq.s32.totalorder %s28, 1
      %p238 = por %p236, %p237
      %p239 = scmp.ne.s32.totalorder %s231, %s234
      %p240 = scmp.eq.s32.totalorder %s28, 0
      %p241 = por %p239, %p240
      %p242 = scmp.ne.s32.totalorder %s231, %s234
      %p243 = scmp.eq.s32.totalorder %s33, 1
      %p244 = por %p242, %p243
      %p245 = scmp.ne.s32.totalorder %s234, %s235
      %p246 = scmp.eq.s32.totalorder %s33, 0
      %p247 = por %p245, %p246
      %p248 = scmp.ne.s32.totalorder %s234, %s235
      %p249 = scmp.eq.s32.totalorder %s34, 1
      %p250 = por %p248, %p249
      %p252 = scmp.ne.s32.totalorder %s235, %s251
      %p253 = scmp.eq.s32.totalorder %s34, 0
      %p254 = por %p252, %p253
      %s255 = ssub.s32 %s28, %s35
      %p256 = scmp.eq.s32.totalorder %s255, 0
      %s258 = sadd.s32 %s257, 1
      %s259 = scalar_select %p256, %s257, %s258
      %p262 = pneg %p256
      %p263 = scmp.eq.s32.totalorder %s28, 1
      %p264 = por %p262, %p263
      %p265 = scmp.ne.s32.totalorder %s257, %s260
      %p266 = scmp.eq.s32.totalorder %s28, 0
      %p267 = por %p265, %p266
      %p268 = scmp.ne.s32.totalorder %s257, %s260
      %p269 = scmp.eq.s32.totalorder %s33, 1
      %p270 = por %p268, %p269
      %p271 = scmp.ne.s32.totalorder %s260, %s261
      %p272 = scmp.eq.s32.totalorder %s33, 0
      %p273 = por %p271, %p272
      %p274 = scmp.ne.s32.totalorder %s260, %s261
      %p275 = scmp.eq.s32.totalorder %s34, 1
      %p276 = por %p274, %p275
      %p278 = scmp.ne.s32.totalorder %s261, %s277
      %p279 = scmp.eq.s32.totalorder %s34, 0
      %p280 = por %p278, %p279
      %p281 = scmp.le.s32.totalorder 1, %s28
      %p282 = scmp.lt.s32.totalorder %s28, 3
      %p283 = pnand %p281, %p282
      %p284 = pneg %p283
      // Predicated region
      $region9: #{tpu_custom_call.1} parent=5 // pred_check
        _
      $region10: #{tpu_custom_call.1} parent=5 // pred_check_branch
        %286 = sbr.rel (%p283) target = $region12
      $region11: #{tpu_custom_call.1} parent=5 // pred_region
        %s287 = ssub.s32 %s28, 1
        // Predicated region
        $region13: #{tpu_custom_call.1} parent=11 // pred_check
          %p288 = pneg %p101
        $region14: #{tpu_custom_call.1} parent=11 // pred_check_branch
          %290 = sbr.rel (%p288) target = $region16
        $region15: #{tpu_custom_call.1} parent=11 // pred_region
          _
        $region16: #{tpu_custom_call.1} parent=11 // pred_fallthru
          _
        // Predicated region
        $region17: #{tpu_custom_call.1} parent=11 // pred_check
          %p291 = pneg %p122
        $region18: #{tpu_custom_call.1} parent=11 // pred_check_branch
          %293 = sbr.rel (%p291) target = $region20
        $region19: #{tpu_custom_call.1} parent=11 // pred_region
          _
        $region20: #{tpu_custom_call.1} parent=11 // pred_fallthru
          _
        // Predicated region
        $region21: #{tpu_custom_call.1} parent=11 // pred_check
          %p294 = pneg %p221
        $region22: #{tpu_custom_call.1} parent=11 // pred_check_branch
          %296 = sbr.rel (%p294) target = $region24
        $region23: #{tpu_custom_call.1} parent=11 // pred_region
          _
        $region24: #{tpu_custom_call.1} parent=11 // pred_fallthru
          _
      $region12: #{tpu_custom_call.1} parent=5 // pred_fallthru
        _
      %p297 = scmp.lt.s32.totalorder %s28, 2
      // Predicated region
      $region25: #{tpu_custom_call.1} parent=5 // pred_check
        %p298 = pneg %p297
      $region26: #{tpu_custom_call.1} parent=5 // pred_check_branch
        %300 = sbr.rel (%p298) target = $region28
      $region27: #{tpu_custom_call.1} parent=5 // pred_region
        // Predicated region
        $region29: #{tpu_custom_call.1} parent=27 // pred_check
          %p301 = pneg %p48
        $region30: #{tpu_custom_call.1} parent=27 // pred_check_branch
          %303 = sbr.rel (%p301) target = $region32
        $region31: #{tpu_custom_call.1} parent=27 // pred_region
          %s304 = sand.u32 %s38, 1
          %s305 = scalar_lea.sflag [#allocation3], %s304
          %s306 = sand.u32 %s38, 1
          %s307 = smul.addr %s306, 4
          %s308 = scalar_lea.vmem [#allocation2], %s307
          %s310 = ssub.s32 64, 64
          %311 = vsyncadd %s305, %s310
          %s312 = smul.addr %s28, 64
          %s313 = scalar_lea.hbm %s0, %s312
          %s315 = sshll.u32 %s308, 4
          %s316 = int_to_ptr.vmem [resolvable:$true] %s315
          %318 = dma.hbm_to_vmem [thread:$0]  %s313, 64, %s316, %s305
        $region32: #{tpu_custom_call.1} parent=27 // pred_fallthru
          _
        // Predicated region
        $region33: #{tpu_custom_call.1} parent=27 // pred_check
          %p319 = pneg %p74
        $region34: #{tpu_custom_call.1} parent=27 // pred_check_branch
          %321 = sbr.rel (%p319) target = $region36
        $region35: #{tpu_custom_call.1} parent=27 // pred_region
          %s322 = sand.u32 %s64, 1
          %s323 = scalar_lea.sflag [#allocation6], %s322
          %s324 = sand.u32 %s64, 1
          %s325 = smul.addr %s324, 4
          %s326 = scalar_lea.vmem [#allocation5], %s325
          %s328 = ssub.s32 64, 64
          %329 = vsyncadd %s323, %s328
          %s330 = smul.addr %s28, 64
          %s331 = scalar_lea.hbm %s1, %s330
          %s333 = sshll.u32 %s326, 4
          %s334 = int_to_ptr.vmem [resolvable:$true] %s333
          %336 = dma.hbm_to_vmem [thread:$0]  %s331, 64, %s334, %s323
        $region36: #{tpu_custom_call.1} parent=27 // pred_fallthru
          _
        // Predicated region
        $region37: #{tpu_custom_call.1} parent=27 // pred_check
          %p337 = pneg %p142
        $region38: #{tpu_custom_call.1} parent=27 // pred_check_branch
          %339 = sbr.rel (%p337) target = $region40
        $region39: #{tpu_custom_call.1} parent=27 // pred_region
          %p340 = scmp.lt.s32.totalorder %s28, 1
          %s341 = scalar_select %p340, %s28, 1
          %s342 = smul.addr %s341, 8
          %s343 = scalar_lea.vmem %s4, %s342
        $region40: #{tpu_custom_call.1} parent=27 // pred_fallthru
          _
        // Predicated region
        $region41: #{tpu_custom_call.1} parent=27 // pred_check
          %p344 = pneg %p168
        $region42: #{tpu_custom_call.1} parent=27 // pred_check_branch
          %346 = sbr.rel (%p344) target = $region44
        $region43: #{tpu_custom_call.1} parent=27 // pred_region
          %p347 = scmp.lt.s32.totalorder %s28, 1
          %s348 = scalar_select %p347, %s28, 1
          %s349 = smul.addr %s348, 8
          %s350 = scalar_lea.vmem %s5, %s349
        $region44: #{tpu_custom_call.1} parent=27 // pred_fallthru
          _
        // Predicated region
        $region45: #{tpu_custom_call.1} parent=27 // pred_check
          %p351 = pneg %p194
        $region46: #{tpu_custom_call.1} parent=27 // pred_check_branch
          %353 = sbr.rel (%p351) target = $region48
        $region47: #{tpu_custom_call.1} parent=27 // pred_region
          %p354 = scmp.lt.s32.totalorder %s28, 1
          %s355 = scalar_select %p354, %s28, 1
          %s356 = smul.addr %s355, 8
          %s357 = scalar_lea.vmem %s6, %s356
        $region48: #{tpu_custom_call.1} parent=27 // pred_fallthru
          _
      $region28: #{tpu_custom_call.1} parent=5 // pred_fallthru
        _
      %p358 = scmp.le.s32.totalorder 1, %s28
      %p359 = scmp.lt.s32.totalorder %s28, 3
      %p360 = pnand %p358, %p359
      %p361 = pneg %p360
      // Predicated region
      $region49: #{tpu_custom_call.1} parent=5 // pred_check
        _
      $region50: #{tpu_custom_call.1} parent=5 // pred_check_branch
        %363 = sbr.rel (%p360) target = $region52
      $region51: #{tpu_custom_call.1} parent=5 // pred_region
        %s364 = ssub.s32 %s28, 1
        %s365 = sand.u32 %s41, 1
        %s366 = scalar_lea.sflag [#allocation3], %s365
        %s367 = sand.u32 %s41, 1
        %s368 = smul.addr %s367, 4
        %s369 = scalar_lea.vmem [#allocation2], %s368
        // Predicated region
        $region53: #{tpu_custom_call.1} parent=51 // pred_check
          %p370 = pneg %p54
        $region54: #{tpu_custom_call.1} parent=51 // pred_check_branch
          %372 = sbr.rel (%p370) target = $region56
        $region55: #{tpu_custom_call.1} parent=51 // pred_region
          %373 = dma.done %s366, 64
        $region56: #{tpu_custom_call.1} parent=51 // pred_fallthru
          _
        %s374 = sand.u32 %s67, 1
        %s375 = scalar_lea.sflag [#allocation6], %s374
        %s376 = sand.u32 %s67, 1
        %s377 = smul.addr %s376, 4
        %s378 = scalar_lea.vmem [#allocation5], %s377
        // Predicated region
        $region57: #{tpu_custom_call.1} parent=51 // pred_check
          %p379 = pneg %p80
        $region58: #{tpu_custom_call.1} parent=51 // pred_check_branch
          %381 = sbr.rel (%p379) target = $region60
        $region59: #{tpu_custom_call.1} parent=51 // pred_region
          %382 = dma.done %s375, 64
        $region60: #{tpu_custom_call.1} parent=51 // pred_fallthru
          _
        %s383 = sand.u32 %s41, 1
        %s384 = scalar_lea.sflag [#allocation3], %s383
        %s385 = sand.u32 %s41, 1
        %s386 = smul.addr %s385, 4
        %s387 = scalar_lea.vmem [#allocation2], %s386
        %p388 = pneg %p54
        %p389 = pneg %p51
        %s390 = sand.u32 %s67, 1
        %s391 = scalar_lea.sflag [#allocation6], %s390
        %s392 = sand.u32 %s67, 1
        %s393 = smul.addr %s392, 4
        %s394 = scalar_lea.vmem [#allocation5], %s393
        %p395 = pneg %p80
        %p396 = pneg %p77
        %p397 = pneg %p101
        %p398 = pneg %p98
        %p399 = pneg %p122
        %p400 = pneg %p119
        %p401 = scmp.lt.s32.totalorder %s33, 1
        %s402 = scalar_select %p401, %s33, 1
        %s403 = smul.addr %s402, 8
        %s404 = scalar_lea.vmem %s4, %s403
        %p405 = pneg %p148
        %p406 = pneg %p145
        %p407 = scmp.lt.s32.totalorder %s33, 1
        %s408 = scalar_select %p407, %s33, 1
        %s409 = smul.addr %s408, 8
        %s410 = scalar_lea.vmem %s5, %s409
        %p411 = pneg %p174
        %p412 = pneg %p171
        %p413 = scmp.lt.s32.totalorder %s33, 1
        %s414 = scalar_select %p413, %s33, 1
        %s415 = smul.addr %s414, 8
        %s416 = scalar_lea.vmem %s6, %s415
        %p417 = pneg %p200
        %p418 = pneg %p197
        %p419 = pneg %p221
        %p420 = pneg %p218
        %p421 = pneg %p247
        %p422 = pneg %p244
        %s423 = sand.u32 %s234, 1
        %s424 = scalar_lea.sflag [#allocation4], %s423
        %s425 = sand.u32 %s234, 1
        %s426 = smul.addr %s425, 8
        %s427 = scalar_lea.vmem [#allocation7], %s426
        %p428 = pneg %p273
        %p429 = pneg %p270
        %s430 = sand.u32 %s260, 1
        %s431 = scalar_lea.sflag [#allocation9], %s430
        %s432 = sand.u32 %s260, 1
        %s433 = smul.addr %s432, 4
        %s434 = scalar_lea.vmem [#allocation8], %s433
        %p435 = scmp.lt.s32.totalorder %s33, 1
        %s436 = scalar_select %p435, %s33, 1
        %s437 = smul.addr %s436, 8
        %s438 = scalar_lea.vmem %s4, %s437
        %p439 = scmp.lt.s32.totalorder %s33, 1
        %s440 = scalar_select %p439, %s33, 1
        %s441 = smul.addr %s440, 8
        %s442 = scalar_lea.vmem %s5, %s441
        %p443 = scmp.lt.s32.totalorder %s33, 1
        %s444 = scalar_select %p443, %s33, 1
        %s445 = smul.addr %s444, 8
        %s446 = scalar_lea.vmem %s6, %s445
        %v448 = vld [vmem:[%s369] sm:$0xf]
        %v449 = vld [vmem:[%s2] sm:$0xf]
        %v450 = vld [vmem:[%s2 + $0x4] sm:$0xf]
        %v453 = vunpack.c.l.b16 %v449
        %v454 = vunpack.c.l.b16 %v450
        %v455 = vpack.c.b16 %v454, %v453
        %vm457 = vcmask 130048
        %v459 = vsel %vm457, %v448, 0
        %461 = vmatprep.subr.bf16.mxu0 0
        %462 = vmatpush1.bf16.msra.mxu0 %v455
        %463 = vmatprep.subr.bf16.mxu0 0
        %464 = vmatpush1.bf16.msra.mxu0 0
        %465 = vmatprep.subr.bf16.mxu0 0
        %466 = vmatpush1.bf16.msra.mxu0 0
        %467 = vmatprep.subr.bf16.mxu0 0
        %468 = vmatpush1.bf16.msra.mxu0 0
        %469 = vmatprep.subr.bf16.mxu0 0
        %470 = vmatpush1.bf16.msra.mxu0 0
        %471 = vmatprep.subr.bf16.mxu0 0
        %472 = vmatpush1.bf16.msra.mxu0 0
        %473 = vmatprep.subr.bf16.mxu0 0
        %474 = vmatpush1.bf16.msra.mxu0 0
        %475 = vmatprep.subr.bf16.mxu0 0
        %476 = vmatpush1.bf16.msra.mxu0 0
        %477 = vmatprep.subr.bf16.mxu0 0
        %478 = vmatpush1.bf16.msra.mxu0 0
        %479 = vmatprep.subr.bf16.mxu0 0
        %480 = vmatpush1.bf16.msra.mxu0 0
        %481 = vmatprep.subr.bf16.mxu0 0
        %482 = vmatpush1.bf16.msra.mxu0 0
        %483 = vmatprep.subr.bf16.mxu0 0
        %484 = vmatpush1.bf16.msra.mxu0 0
        %485 = vmatprep.subr.bf16.mxu0 0
        %486 = vmatpush1.bf16.msra.mxu0 0
        %487 = vmatprep.subr.bf16.mxu0 0
        %488 = vmatpush1.bf16.msra.mxu0 0
        %489 = vmatprep.subr.bf16.mxu0 0
        %490 = vmatpush1.bf16.msra.mxu0 0
        %491 = vmatprep.subr.bf16.mxu0 0
        %492 = vmatpush1.bf16.msra.mxu0 0
        %493 = vmatprep.mubr.bf16.mxu0 0
        %494 = vmatmul.mubr.bf16.gmra.mrb[0].mxu0 %v459
        %v495 = vpop.f32.mrb[0].mxu0
        %v496 = vadd.f32 0.0, %v495
        %v497 = vpop.f32.mrb[0].mxu0
        %v498 = vpop.f32.mrb[0].mxu0
        %v499 = vpop.f32.mrb[0].mxu0
        %500 = vdwg.mxu0
        %v501 = vld [vmem:[%s378] sm:$0xf]
        %v502 = vld [vmem:[%s3] sm:$0xf]
        %v503 = vld [vmem:[%s3 + $0x4] sm:$0xf]
        %v506 = vunpack.c.l.b16 %v502
        %v507 = vunpack.c.l.b16 %v503
        %v508 = vpack.c.b16 %v507, %v506
        %v511 = vsel %vm457, %v501, 0
        %513 = vmatprep.subr.bf16.mxu0 0
        %514 = vmatpush1.bf16.msra.mxu0 %v508
        %515 = vmatprep.subr.bf16.mxu0 0
        %516 = vmatpush1.bf16.msra.mxu0 0
        %517 = vmatprep.subr.bf16.mxu0 0
        %518 = vmatpush1.bf16.msra.mxu0 0
        %519 = vmatprep.subr.bf16.mxu0 0
        %520 = vmatpush1.bf16.msra.mxu0 0
        %521 = vmatprep.subr.bf16.mxu0 0
        %522 = vmatpush1.bf16.msra.mxu0 0
        %523 = vmatprep.subr.bf16.mxu0 0
        %524 = vmatpush1.bf16.msra.mxu0 0
        %525 = vmatprep.subr.bf16.mxu0 0
        %526 = vmatpush1.bf16.msra.mxu0 0
        %527 = vmatprep.subr.bf16.mxu0 0
        %528 = vmatpush1.bf16.msra.mxu0 0
        %529 = vmatprep.subr.bf16.mxu0 0
        %530 = vmatpush1.bf16.msra.mxu0 0
        %531 = vmatprep.subr.bf16.mxu0 0
        %532 = vmatpush1.bf16.msra.mxu0 0
        %533 = vmatprep.subr.bf16.mxu0 0
        %534 = vmatpush1.bf16.msra.mxu0 0
        %535 = vmatprep.subr.bf16.mxu0 0
        %536 = vmatpush1.bf16.msra.mxu0 0
        %537 = vmatprep.subr.bf16.mxu0 0
        %538 = vmatpush1.bf16.msra.mxu0 0
        %539 = vmatprep.subr.bf16.mxu0 0
        %540 = vmatpush1.bf16.msra.mxu0 0
        %541 = vmatprep.subr.bf16.mxu0 0
        %542 = vmatpush1.bf16.msra.mxu0 0
        %543 = vmatprep.subr.bf16.mxu0 0
        %544 = vmatpush1.bf16.msra.mxu0 0
        %545 = vmatprep.mubr.bf16.mxu0 0
        %546 = vmatmul.mubr.bf16.gmra.mrb[0].mxu0 %v511
        %v547 = vpop.f32.mrb[0].mxu0
        %v548 = vadd.f32 0.0, %v547
        %v549 = vpop.f32.mrb[0].mxu0
        %v550 = vpop.f32.mrb[0].mxu0
        %v551 = vpop.f32.mrb[0].mxu0
        %552 = vdwg.mxu0
        %v553 = vld [vmem:[%s438] sm:$0xff]
        %v554 = vadd.f32 %v553, %v496
        %v555 = vld [vmem:[%s7] sm:$0xff]
        %v556 = vld [vmem:[%s7 + $0x8] sm:$0x1]
        %v557 = vlaneseq
        %v558 = vshrl.u32 %v557, 7
        %v559 = vsub.s32 0, %v558
        %v560 = vrot.slane %v556, %v559
        %vm561 = vcmask 64512
        %v563 = vsel %vm561, %v554, 0
        %565 = vmatprep.subr.mxu0 0.0
        %566 = vmatpush1.msra.mxu0 %v555
        %567 = vmatprep.subr.mxu0 0.0
        %568 = vmatpush1.msra.mxu0 0.0
        %569 = vmatprep.subr.mxu0 0.0
        %570 = vmatpush1.msra.mxu0 0.0
        %571 = vmatprep.subr.mxu0 0.0
        %572 = vmatpush1.msra.mxu0 0.0
        %573 = vmatprep.subr.mxu0 0.0
        %574 = vmatpush1.msra.mxu0 0.0
        %575 = vmatprep.subr.mxu0 0.0
        %576 = vmatpush1.msra.mxu0 0.0
        %577 = vmatprep.subr.mxu0 0.0
        %578 = vmatpush1.msra.mxu0 0.0
        %579 = vmatprep.subr.mxu0 0.0
        %580 = vmatpush1.msra.mxu0 0.0
        %581 = vmatprep.subr.mxu0 0.0
        %582 = vmatpush1.msra.mxu0 0.0
        %583 = vmatprep.subr.mxu0 0.0
        %584 = vmatpush1.msra.mxu0 0.0
        %585 = vmatprep.subr.mxu0 0.0
        %586 = vmatpush1.msra.mxu0 0.0
        %587 = vmatprep.subr.mxu0 0.0
        %588 = vmatpush1.msra.mxu0 0.0
        %589 = vmatprep.subr.mxu0 0.0
        %590 = vmatpush1.msra.mxu0 0.0
        %591 = vmatprep.subr.mxu0 0.0
        %592 = vmatpush1.msra.mxu0 0.0
        %593 = vmatprep.subr.mxu0 0.0
        %594 = vmatpush1.msra.mxu0 0.0
        %595 = vmatprep.subr.mxu0 0.0
        %596 = vmatpush1.msra.mxu0 0.0
        %597 = vmatprep.subr.mxu0 0.0
        %598 = vmatpush1.msra.mxu0 0.0
        %599 = vmatprep.subr.mxu0 0.0
        %600 = vmatpush1.msra.mxu0 0.0
        %601 = vmatprep.subr.mxu0 0.0
        %602 = vmatpush1.msra.mxu0 0.0
        %603 = vmatprep.subr.mxu0 0.0
        %604 = vmatpush1.msra.mxu0 0.0
        %605 = vmatprep.subr.mxu0 0.0
        %606 = vmatpush1.msra.mxu0 0.0
        %607 = vmatprep.subr.mxu0 0.0
        %608 = vmatpush1.msra.mxu0 0.0
        %609 = vmatprep.subr.mxu0 0.0
        %610 = vmatpush1.msra.mxu0 0.0
        %611 = vmatprep.subr.mxu0 0.0
        %612 = vmatpush1.msra.mxu0 0.0
        %613 = vmatprep.subr.mxu0 0.0
        %614 = vmatpush1.msra.mxu0 0.0
        %615 = vmatprep.subr.mxu0 0.0
        %616 = vmatpush1.msra.mxu0 0.0
        %617 = vmatprep.subr.mxu0 0.0
        %618 = vmatpush1.msra.mxu0 0.0
        %619 = vmatprep.subr.mxu0 0.0
        %620 = vmatpush1.msra.mxu0 0.0
        %621 = vmatprep.subr.mxu0 0.0
        %622 = vmatpush1.msra.mxu0 0.0
        %623 = vmatprep.subr.mxu0 0.0
        %624 = vmatpush1.msra.mxu0 0.0
        %625 = vmatprep.subr.mxu0 0.0
        %626 = vmatpush1.msra.mxu0 0.0
        %627 = vmatprep.subr.mxu0 0.0
        %628 = vmatpush1.msra.mxu0 0.0
        %629 = vmatprep.mubr.f32.mxu0 0.0
        %630 = vmatmul.mubr.f32.gmra.mrb[0].mxu0 %v563
        %v631 = vpop.f32.mrb[0].mxu0
        %v632 = vadd.f32 %v560, %v631
        %v633 = vpop.f32.mrb[0].mxu0
        %634 = vdwg.mxu0
        %v635 = vmax.f32 %v632, 0.0
        %v636 = vld [vmem:[%s7 + $0x10] sm:$0xff]
        %v637 = vld [vmem:[%s7 + $0x18] sm:$0xff]
        %v638 = vld [vmem:[%s7 + $0x20] sm:$0xff]
        %v639 = vld [vmem:[%s7 + $0x28] sm:$0xff]
        %v640 = vld [vmem:[%s7 + $0x30] sm:$0x1]
        %v641 = vlaneseq
        %v642 = vshrl.u32 %v641, 7
        %v643 = vsub.s32 0, %v642
        %v644 = vrot.slane %v640, %v643
        %vm645 = vcmask 261120
        %v647 = vsel %vm645, %v635, 0
        %649 = vmatprep.subr.mxu0 0.0
        %650 = vmatpush1.msra.mxu0 %v636
        %651 = vmatprep.subr.mxu0 0.0
        %652 = vmatpush1.msra.mxu0 %v637
        %653 = vmatprep.subr.mxu0 0.0
        %654 = vmatpush1.msra.mxu0 %v638
        %655 = vmatprep.subr.mxu0 0.0
        %656 = vmatpush1.msra.mxu0 %v639
        %657 = vmatprep.subr.mxu0 0.0
        %658 = vmatpush1.msra.mxu0 0.0
        %659 = vmatprep.subr.mxu0 0.0
        %660 = vmatpush1.msra.mxu0 0.0
        %661 = vmatprep.subr.mxu0 0.0
        %662 = vmatpush1.msra.mxu0 0.0
        %663 = vmatprep.subr.mxu0 0.0
        %664 = vmatpush1.msra.mxu0 0.0
        %665 = vmatprep.subr.mxu0 0.0
        %666 = vmatpush1.msra.mxu0 0.0
        %667 = vmatprep.subr.mxu0 0.0
        %668 = vmatpush1.msra.mxu0 0.0
        %669 = vmatprep.subr.mxu0 0.0
        %670 = vmatpush1.msra.mxu0 0.0
        %671 = vmatprep.subr.mxu0 0.0
        %672 = vmatpush1.msra.mxu0 0.0
        %673 = vmatprep.subr.mxu0 0.0
        %674 = vmatpush1.msra.mxu0 0.0
        %675 = vmatprep.subr.mxu0 0.0
        %676 = vmatpush1.msra.mxu0 0.0
        %677 = vmatprep.subr.mxu0 0.0
        %678 = vmatpush1.msra.mxu0 0.0
        %679 = vmatprep.subr.mxu0 0.0
        %680 = vmatpush1.msra.mxu0 0.0
        %681 = vmatprep.subr.mxu0 0.0
        %682 = vmatpush1.msra.mxu0 0.0
        %683 = vmatprep.subr.mxu0 0.0
        %684 = vmatpush1.msra.mxu0 0.0
        %685 = vmatprep.subr.mxu0 0.0
        %686 = vmatpush1.msra.mxu0 0.0
        %687 = vmatprep.subr.mxu0 0.0
        %688 = vmatpush1.msra.mxu0 0.0
        %689 = vmatprep.subr.mxu0 0.0
        %690 = vmatpush1.msra.mxu0 0.0
        %691 = vmatprep.subr.mxu0 0.0
        %692 = vmatpush1.msra.mxu0 0.0
        %693 = vmatprep.subr.mxu0 0.0
        %694 = vmatpush1.msra.mxu0 0.0
        %695 = vmatprep.subr.mxu0 0.0
        %696 = vmatpush1.msra.mxu0 0.0
        %697 = vmatprep.subr.mxu0 0.0
        %698 = vmatpush1.msra.mxu0 0.0
        %699 = vmatprep.subr.mxu0 0.0
        %700 = vmatpush1.msra.mxu0 0.0
        %701 = vmatprep.subr.mxu0 0.0
        %702 = vmatpush1.msra.mxu0 0.0
        %703 = vmatprep.subr.mxu0 0.0
        %704 = vmatpush1.msra.mxu0 0.0
        %705 = vmatprep.subr.mxu0 0.0
        %706 = vmatpush1.msra.mxu0 0.0
        %707 = vmatprep.subr.mxu0 0.0
        %708 = vmatpush1.msra.mxu0 0.0
        %709 = vmatprep.subr.mxu0 0.0
        %710 = vmatpush1.msra.mxu0 0.0
        %711 = vmatprep.subr.mxu0 0.0
        %712 = vmatpush1.msra.mxu0 0.0
        %713 = vmatprep.mubr.f32.mxu0 0.0
        %714 = vmatmul.mubr.f32.gmra.mrb[0].mxu0 %v647
        %v715 = vpop.f32.mrb[0].mxu0
        %v716 = vadd.f32 %v644, %v715
        %v717 = vpop.f32.mrb[0].mxu0
        %718 = vdwg.mxu0
        %v719 = vld [vmem:[%s442] sm:$0xff]
        %v720 = vadd.f32 %v719, %v548
        %v721 = vld [vmem:[%s7 + $0x38] sm:$0xff]
        %v722 = vld [vmem:[%s7 + $0x40] sm:$0x1]
        %v723 = vlaneseq
        %v724 = vshrl.u32 %v723, 7
        %v725 = vsub.s32 0, %v724
        %v726 = vrot.slane %v722, %v725
        %v728 = vsel %vm561, %v720, 0
        %730 = vmatprep.subr.mxu0 0.0
        %731 = vmatpush1.msra.mxu0 %v721
        %732 = vmatprep.subr.mxu0 0.0
        %733 = vmatpush1.msra.mxu0 0.0
        %734 = vmatprep.subr.mxu0 0.0
        %735 = vmatpush1.msra.mxu0 0.0
        %736 = vmatprep.subr.mxu0 0.0
        %737 = vmatpush1.msra.mxu0 0.0
        %738 = vmatprep.subr.mxu0 0.0
        %739 = vmatpush1.msra.mxu0 0.0
        %740 = vmatprep.subr.mxu0 0.0
        %741 = vmatpush1.msra.mxu0 0.0
        %742 = vmatprep.subr.mxu0 0.0
        %743 = vmatpush1.msra.mxu0 0.0
        %744 = vmatprep.subr.mxu0 0.0
        %745 = vmatpush1.msra.mxu0 0.0
        %746 = vmatprep.subr.mxu0 0.0
        %747 = vmatpush1.msra.mxu0 0.0
        %748 = vmatprep.subr.mxu0 0.0
        %749 = vmatpush1.msra.mxu0 0.0
        %750 = vmatprep.subr.mxu0 0.0
        %751 = vmatpush1.msra.mxu0 0.0
        %752 = vmatprep.subr.mxu0 0.0
        %753 = vmatpush1.msra.mxu0 0.0
        %754 = vmatprep.subr.mxu0 0.0
        %755 = vmatpush1.msra.mxu0 0.0
        %756 = vmatprep.subr.mxu0 0.0
        %757 = vmatpush1.msra.mxu0 0.0
        %758 = vmatprep.subr.mxu0 0.0
        %759 = vmatpush1.msra.mxu0 0.0
        %760 = vmatprep.subr.mxu0 0.0
        %761 = vmatpush1.msra.mxu0 0.0
        %762 = vmatprep.subr.mxu0 0.0
        %763 = vmatpush1.msra.mxu0 0.0
        %764 = vmatprep.subr.mxu0 0.0
        %765 = vmatpush1.msra.mxu0 0.0
        %766 = vmatprep.subr.mxu0 0.0
        %767 = vmatpush1.msra.mxu0 0.0
        %768 = vmatprep.subr.mxu0 0.0
        %769 = vmatpush1.msra.mxu0 0.0
        %770 = vmatprep.subr.mxu0 0.0
        %771 = vmatpush1.msra.mxu0 0.0
        %772 = vmatprep.subr.mxu0 0.0
        %773 = vmatpush1.msra.mxu0 0.0
        %774 = vmatprep.subr.mxu0 0.0
        %775 = vmatpush1.msra.mxu0 0.0
        %776 = vmatprep.subr.mxu0 0.0
        %777 = vmatpush1.msra.mxu0 0.0
        %778 = vmatprep.subr.mxu0 0.0
        %779 = vmatpush1.msra.mxu0 0.0
        %780 = vmatprep.subr.mxu0 0.0
        %781 = vmatpush1.msra.mxu0 0.0
        %782 = vmatprep.subr.mxu0 0.0
        %783 = vmatpush1.msra.mxu0 0.0
        %784 = vmatprep.subr.mxu0 0.0
        %785 = vmatpush1.msra.mxu0 0.0
        %786 = vmatprep.subr.mxu0 0.0
        %787 = vmatpush1.msra.mxu0 0.0
        %788 = vmatprep.subr.mxu0 0.0
        %789 = vmatpush1.msra.mxu0 0.0
        %790 = vmatprep.subr.mxu0 0.0
        %791 = vmatpush1.msra.mxu0 0.0
        %792 = vmatprep.subr.mxu0 0.0
        %793 = vmatpush1.msra.mxu0 0.0
        %794 = vmatprep.mubr.f32.mxu0 0.0
        %795 = vmatmul.mubr.f32.gmra.mrb[0].mxu0 %v728
        %v796 = vpop.f32.mrb[0].mxu0
        %v797 = vadd.f32 %v726, %v796
        %v798 = vpop.f32.mrb[0].mxu0
        %799 = vdwg.mxu0
        %v800 = vmax.f32 %v797, 0.0
        %v801 = vld [vmem:[%s7 + $0x48] sm:$0xff]
        %v802 = vld [vmem:[%s7 + $0x50] sm:$0xff]
        %v803 = vld [vmem:[%s7 + $0x58] sm:$0xff]
        %v804 = vld [vmem:[%s7 + $0x60] sm:$0xff]
        %v805 = vld [vmem:[%s7 + $0x68] sm:$0x1]
        %v806 = vlaneseq
        %v807 = vshrl.u32 %v806, 7
        %v808 = vsub.s32 0, %v807
        %v809 = vrot.slane %v805, %v808
        %v811 = vsel %vm645, %v800, 0
        %813 = vmatprep.subr.mxu0 0.0
        %814 = vmatpush1.msra.mxu0 %v801
        %815 = vmatprep.subr.mxu0 0.0
        %816 = vmatpush1.msra.mxu0 %v802
        %817 = vmatprep.subr.mxu0 0.0
        %818 = vmatpush1.msra.mxu0 %v803
        %819 = vmatprep.subr.mxu0 0.0
        %820 = vmatpush1.msra.mxu0 %v804
        %821 = vmatprep.subr.mxu0 0.0
        %822 = vmatpush1.msra.mxu0 0.0
        %823 = vmatprep.subr.mxu0 0.0
        %824 = vmatpush1.msra.mxu0 0.0
        %825 = vmatprep.subr.mxu0 0.0
        %826 = vmatpush1.msra.mxu0 0.0
        %827 = vmatprep.subr.mxu0 0.0
        %828 = vmatpush1.msra.mxu0 0.0
        %829 = vmatprep.subr.mxu0 0.0
        %830 = vmatpush1.msra.mxu0 0.0
        %831 = vmatprep.subr.mxu0 0.0
        %832 = vmatpush1.msra.mxu0 0.0
        %833 = vmatprep.subr.mxu0 0.0
        %834 = vmatpush1.msra.mxu0 0.0
        %835 = vmatprep.subr.mxu0 0.0
        %836 = vmatpush1.msra.mxu0 0.0
        %837 = vmatprep.subr.mxu0 0.0
        %838 = vmatpush1.msra.mxu0 0.0
        %839 = vmatprep.subr.mxu0 0.0
        %840 = vmatpush1.msra.mxu0 0.0
        %841 = vmatprep.subr.mxu0 0.0
        %842 = vmatpush1.msra.mxu0 0.0
        %843 = vmatprep.subr.mxu0 0.0
        %844 = vmatpush1.msra.mxu0 0.0
        %845 = vmatprep.subr.mxu0 0.0
        %846 = vmatpush1.msra.mxu0 0.0
        %847 = vmatprep.subr.mxu0 0.0
        %848 = vmatpush1.msra.mxu0 0.0
        %849 = vmatprep.subr.mxu0 0.0
        %850 = vmatpush1.msra.mxu0 0.0
        %851 = vmatprep.subr.mxu0 0.0
        %852 = vmatpush1.msra.mxu0 0.0
        %853 = vmatprep.subr.mxu0 0.0
        %854 = vmatpush1.msra.mxu0 0.0
        %855 = vmatprep.subr.mxu0 0.0
        %856 = vmatpush1.msra.mxu0 0.0
        %857 = vmatprep.subr.mxu0 0.0
        %858 = vmatpush1.msra.mxu0 0.0
        %859 = vmatprep.subr.mxu0 0.0
        %860 = vmatpush1.msra.mxu0 0.0
        %861 = vmatprep.subr.mxu0 0.0
        %862 = vmatpush1.msra.mxu0 0.0
        %863 = vmatprep.subr.mxu0 0.0
        %864 = vmatpush1.msra.mxu0 0.0
        %865 = vmatprep.subr.mxu0 0.0
        %866 = vmatpush1.msra.mxu0 0.0
        %867 = vmatprep.subr.mxu0 0.0
        %868 = vmatpush1.msra.mxu0 0.0
        %869 = vmatprep.subr.mxu0 0.0
        %870 = vmatpush1.msra.mxu0 0.0
        %871 = vmatprep.subr.mxu0 0.0
        %872 = vmatpush1.msra.mxu0 0.0
        %873 = vmatprep.subr.mxu0 0.0
        %874 = vmatpush1.msra.mxu0 0.0
        %875 = vmatprep.subr.mxu0 0.0
        %876 = vmatpush1.msra.mxu0 0.0
        %877 = vmatprep.mubr.f32.mxu0 0.0
        %878 = vmatmul.mubr.f32.gmra.mrb[0].mxu0 %v811
        %v879 = vpop.f32.mrb[0].mxu0
        %v880 = vadd.f32 %v809, %v879
        %v881 = vpop.f32.mrb[0].mxu0
        %882 = vdwg.mxu0
        %883 = vst.msk [vmem:[%s427] sm:$0xff] %vm645, %v716
        %885 = vrot.lane.b32.xlu0 %v880, 32
        %v886 = vpop.permute.xlu0 %885
        %vm888 = vcmask 523520
        %889 = vst.msk [vmem:[%s427] sm:$0xff] %vm888, %v886
        %v890 = vld [vmem:[%s446] sm:$0xff]
        %891 = vxpose.xlu0.b32.start [1/16] %v890, 128
        %892 = vxpose.xlu0.b32.cont [2/16] 0.0, 128
        %893 = vxpose.xlu0.b32.cont [3/16] 0.0, 128
        %894 = vxpose.xlu0.b32.cont [4/16] 0.0, 128
        %895 = vxpose.xlu0.b32.cont [5/16] 0.0, 128
        %896 = vxpose.xlu0.b32.cont [6/16] 0.0, 128
        %897 = vxpose.xlu0.b32.cont [7/16] 0.0, 128
        %898 = vxpose.xlu0.b32.cont [8/16] 0.0, 128
        %899 = vxpose.xlu0.b32.cont [9/16] 0.0, 128
        %900 = vxpose.xlu0.b32.cont [10/16] 0.0, 128
        %901 = vxpose.xlu0.b32.cont [11/16] 0.0, 128
        %902 = vxpose.xlu0.b32.cont [12/16] 0.0, 128
        %903 = vxpose.xlu0.b32.cont [13/16] 0.0, 128
        %904 = vxpose.xlu0.b32.cont [14/16] 0.0, 128
        %905 = vxpose.xlu0.b32.cont [15/16] 0.0, 128
        %906 = vxpose.xlu0.b32.end [16/16] 0.0, 128
        %v907 = vpop.trf.xlu0
        %v908 = vpop.trf.xlu0
        %v909 = vpop.trf.xlu0
        %v910 = vpop.trf.xlu0
        %v911 = vpop.trf.xlu0
        %v912 = vpop.trf.xlu0
        %v913 = vpop.trf.xlu0
        %v914 = vpop.trf.xlu0
        %v915 = vpop.trf.xlu0
        %v916 = vpop.trf.xlu0
        %v917 = vpop.trf.xlu0
        %v918 = vpop.trf.xlu0
        %v919 = vpop.trf.xlu0
        %v920 = vpop.trf.xlu0
        %v921 = vpop.trf.xlu0
        %v922 = vpop.trf.xlu0
        %v924 = vsel %vm561, %v907, 0
        %926 = vmatprep.subr.mxu0 0.0
        %927 = vmatpush1.msra.mxu0 %v716
        %928 = vmatprep.subr.mxu0 0.0
        %929 = vmatpush1.msra.mxu0 0.0
        %930 = vmatprep.subr.mxu0 0.0
        %931 = vmatpush1.msra.mxu0 0.0
        %932 = vmatprep.subr.mxu0 0.0
        %933 = vmatpush1.msra.mxu0 0.0
        %934 = vmatprep.subr.mxu0 0.0
        %935 = vmatpush1.msra.mxu0 0.0
        %936 = vmatprep.subr.mxu0 0.0
        %937 = vmatpush1.msra.mxu0 0.0
        %938 = vmatprep.subr.mxu0 0.0
        %939 = vmatpush1.msra.mxu0 0.0
        %940 = vmatprep.subr.mxu0 0.0
        %941 = vmatpush1.msra.mxu0 0.0
        %942 = vmatprep.subr.mxu0 0.0
        %943 = vmatpush1.msra.mxu0 0.0
        %944 = vmatprep.subr.mxu0 0.0
        %945 = vmatpush1.msra.mxu0 0.0
        %946 = vmatprep.subr.mxu0 0.0
        %947 = vmatpush1.msra.mxu0 0.0
        %948 = vmatprep.subr.mxu0 0.0
        %949 = vmatpush1.msra.mxu0 0.0
        %950 = vmatprep.subr.mxu0 0.0
        %951 = vmatpush1.msra.mxu0 0.0
        %952 = vmatprep.subr.mxu0 0.0
        %953 = vmatpush1.msra.mxu0 0.0
        %954 = vmatprep.subr.mxu0 0.0
        %955 = vmatpush1.msra.mxu0 0.0
        %956 = vmatprep.subr.mxu0 0.0
        %957 = vmatpush1.msra.mxu0 0.0
        %958 = vmatprep.subr.mxu0 0.0
        %959 = vmatpush1.msra.mxu0 0.0
        %960 = vmatprep.subr.mxu0 0.0
        %961 = vmatpush1.msra.mxu0 0.0
        %962 = vmatprep.subr.mxu0 0.0
        %963 = vmatpush1.msra.mxu0 0.0
        %964 = vmatprep.subr.mxu0 0.0
        %965 = vmatpush1.msra.mxu0 0.0
        %966 = vmatprep.subr.mxu0 0.0
        %967 = vmatpush1.msra.mxu0 0.0
        %968 = vmatprep.subr.mxu0 0.0
        %969 = vmatpush1.msra.mxu0 0.0
        %970 = vmatprep.subr.mxu0 0.0
        %971 = vmatpush1.msra.mxu0 0.0
        %972 = vmatprep.subr.mxu0 0.0
        %973 = vmatpush1.msra.mxu0 0.0
        %974 = vmatprep.subr.mxu0 0.0
        %975 = vmatpush1.msra.mxu0 0.0
        %976 = vmatprep.subr.mxu0 0.0
        %977 = vmatpush1.msra.mxu0 0.0
        %978 = vmatprep.subr.mxu0 0.0
        %979 = vmatpush1.msra.mxu0 0.0
        %980 = vmatprep.subr.mxu0 0.0
        %981 = vmatpush1.msra.mxu0 0.0
        %982 = vmatprep.subr.mxu0 0.0
        %983 = vmatpush1.msra.mxu0 0.0
        %984 = vmatprep.subr.mxu0 0.0
        %985 = vmatpush1.msra.mxu0 0.0
        %986 = vmatprep.subr.mxu0 0.0
        %987 = vmatpush1.msra.mxu0 0.0
        %988 = vmatprep.subr.mxu0 0.0
        %989 = vmatpush1.msra.mxu0 0.0
        %990 = vmatprep.mubr.f32.mxu0 0.0
        %991 = vmatmul.mubr.f32.gmra.mrb[0].mxu0 %v924
        %v992 = vpop.f32.mrb[0].mxu0
        %v993 = vadd.f32 0.0, %v992
        %v994 = vpop.f32.mrb[0].mxu0
        %995 = vdwg.mxu0
        %vm996 = vcmask 257024
        %997 = vst.msk [vmem:[%s434] sm:$0xf] %vm996, %v993
        %998 = vmatprep.subr.mxu0 0.0
        %999 = vmatpush1.msra.mxu0 %v880
        %1000 = vmatprep.subr.mxu0 0.0
        %1001 = vmatpush1.msra.mxu0 0.0
        %1002 = vmatprep.subr.mxu0 0.0
        %1003 = vmatpush1.msra.mxu0 0.0
        %1004 = vmatprep.subr.mxu0 0.0
        %1005 = vmatpush1.msra.mxu0 0.0
        %1006 = vmatprep.subr.mxu0 0.0
        %1007 = vmatpush1.msra.mxu0 0.0
        %1008 = vmatprep.subr.mxu0 0.0
        %1009 = vmatpush1.msra.mxu0 0.0
        %1010 = vmatprep.subr.mxu0 0.0
        %1011 = vmatpush1.msra.mxu0 0.0
        %1012 = vmatprep.subr.mxu0 0.0
        %1013 = vmatpush1.msra.mxu0 0.0
        %1014 = vmatprep.subr.mxu0 0.0
        %1015 = vmatpush1.msra.mxu0 0.0
        %1016 = vmatprep.subr.mxu0 0.0
        %1017 = vmatpush1.msra.mxu0 0.0
        %1018 = vmatprep.subr.mxu0 0.0
        %1019 = vmatpush1.msra.mxu0 0.0
        %1020 = vmatprep.subr.mxu0 0.0
        %1021 = vmatpush1.msra.mxu0 0.0
        %1022 = vmatprep.subr.mxu0 0.0
        %1023 = vmatpush1.msra.mxu0 0.0
        %1024 = vmatprep.subr.mxu0 0.0
        %1025 = vmatpush1.msra.mxu0 0.0
        %1026 = vmatprep.subr.mxu0 0.0
        %1027 = vmatpush1.msra.mxu0 0.0
        %1028 = vmatprep.subr.mxu0 0.0
        %1029 = vmatpush1.msra.mxu0 0.0
        %1030 = vmatprep.subr.mxu0 0.0
        %1031 = vmatpush1.msra.mxu0 0.0
        %1032 = vmatprep.subr.mxu0 0.0
        %1033 = vmatpush1.msra.mxu0 0.0
        %1034 = vmatprep.subr.mxu0 0.0
        %1035 = vmatpush1.msra.mxu0 0.0
        %1036 = vmatprep.subr.mxu0 0.0
        %1037 = vmatpush1.msra.mxu0 0.0
        %1038 = vmatprep.subr.mxu0 0.0
        %1039 = vmatpush1.msra.mxu0 0.0
        %1040 = vmatprep.subr.mxu0 0.0
        %1041 = vmatpush1.msra.mxu0 0.0
        %1042 = vmatprep.subr.mxu0 0.0
        %1043 = vmatpush1.msra.mxu0 0.0
        %1044 = vmatprep.subr.mxu0 0.0
        %1045 = vmatpush1.msra.mxu0 0.0
        %1046 = vmatprep.subr.mxu0 0.0
        %1047 = vmatpush1.msra.mxu0 0.0
        %1048 = vmatprep.subr.mxu0 0.0
        %1049 = vmatpush1.msra.mxu0 0.0
        %1050 = vmatprep.subr.mxu0 0.0
        %1051 = vmatpush1.msra.mxu0 0.0
        %1052 = vmatprep.subr.mxu0 0.0
        %1053 = vmatpush1.msra.mxu0 0.0
        %1054 = vmatprep.subr.mxu0 0.0
        %1055 = vmatpush1.msra.mxu0 0.0
        %1056 = vmatprep.subr.mxu0 0.0
        %1057 = vmatpush1.msra.mxu0 0.0
        %1058 = vmatprep.subr.mxu0 0.0
        %1059 = vmatpush1.msra.mxu0 0.0
        %1060 = vmatprep.subr.mxu0 0.0
        %1061 = vmatpush1.msra.mxu0 0.0
        %1062 = vmatprep.mubr.f32.mxu0 0.0
        %1063 = vmatmul.mubr.f32.gmra.mrb[0].mxu0 %v924
        %v1064 = vpop.f32.mrb[0].mxu0
        %v1065 = vadd.f32 0.0, %v1064
        %v1066 = vpop.f32.mrb[0].mxu0
        %1067 = vdwg.mxu0
        %1069 = vrot.lane.b32.xlu0 %v1065, 32
        %v1070 = vpop.permute.xlu0 %1069
        %vm1072 = vcmask 519424
        %1073 = vst.msk [vmem:[%s434] sm:$0xf] %vm1072, %v1070
        %s1074 = sand.u32 %s234, 1
        %s1075 = scalar_lea.sflag [#allocation4], %s1074
        %s1076 = sand.u32 %s234, 1
        %s1077 = smul.addr %s1076, 8
        %s1078 = scalar_lea.vmem [#allocation7], %s1077
        %s1079 = sand.u32 %s260, 1
        %s1080 = scalar_lea.sflag [#allocation9], %s1079
        %s1081 = sand.u32 %s260, 1
        %s1082 = smul.addr %s1081, 4
        %s1083 = scalar_lea.vmem [#allocation8], %s1082
        // Predicated region
        $region61: #{tpu_custom_call.1} parent=51 // pred_check
          %p1084 = pneg %p244
        $region62: #{tpu_custom_call.1} parent=51 // pred_check_branch
          %1086 = sbr.rel (%p1084) target = $region64
        $region63: #{tpu_custom_call.1} parent=51 // pred_region
          %s1088 = ssub.s32 128, 128
          %1089 = vsyncadd %s1075, %s1088
          %s1090 = smul.addr %s33, 128
          %s1091 = scalar_lea.hbm %s8, %s1090
          %s1093 = sshll.u32 %s1078, 4
          %s1094 = int_to_ptr.vmem [resolvable:$true] %s1093
          %1096 = dma.vmem_to_hbm [thread:$0]  %s1094, 128, %s1091, %s1075
        $region64: #{tpu_custom_call.1} parent=51 // pred_fallthru
          _
        // Predicated region
        $region65: #{tpu_custom_call.1} parent=51 // pred_check
          %p1097 = pneg %p270
        $region66: #{tpu_custom_call.1} parent=51 // pred_check_branch
          %1099 = sbr.rel (%p1097) target = $region68
        $region67: #{tpu_custom_call.1} parent=51 // pred_region
          %s1101 = ssub.s32 64, 64
          %1102 = vsyncadd %s1080, %s1101
          %s1103 = smul.addr %s33, 64
          %s1104 = scalar_lea.hbm %s9, %s1103
          %s1106 = sshll.u32 %s1083, 4
          %s1107 = int_to_ptr.vmem [resolvable:$true] %s1106
          %1109 = dma.vmem_to_hbm [thread:$0]  %s1107, 64, %s1104, %s1080
        $region68: #{tpu_custom_call.1} parent=51 // pred_fallthru
          _
      $region52: #{tpu_custom_call.1} parent=5 // pred_fallthru
        _
      %p1110 = scmp.le.s32.totalorder 2, %s28
      // Predicated region
      $region69: #{tpu_custom_call.1} parent=5 // pred_check
        %p1111 = pneg %p1110
      $region70: #{tpu_custom_call.1} parent=5 // pred_check_branch
        %1113 = sbr.rel (%p1111) target = $region72
      $region71: #{tpu_custom_call.1} parent=5 // pred_region
        %s1114 = ssub.s32 %s28, 2
        // Predicated region
        $region73: #{tpu_custom_call.1} parent=71 // pred_check
          %p1115 = pneg %p250
        $region74: #{tpu_custom_call.1} parent=71 // pred_check_branch
          %1117 = sbr.rel (%p1115) target = $region76
        $region75: #{tpu_custom_call.1} parent=71 // pred_region
          %s1118 = sand.u32 %s235, 1
          %s1119 = scalar_lea.sflag [#allocation4], %s1118
          %s1120 = sand.u32 %s235, 1
          %s1121 = smul.addr %s1120, 8
          %s1122 = scalar_lea.vmem [#allocation7], %s1121
          %1123 = dma.done %s1119, 128
        $region76: #{tpu_custom_call.1} parent=71 // pred_fallthru
          _
        // Predicated region
        $region77: #{tpu_custom_call.1} parent=71 // pred_check
          %p1124 = pneg %p276
        $region78: #{tpu_custom_call.1} parent=71 // pred_check_branch
          %1126 = sbr.rel (%p1124) target = $region80
        $region79: #{tpu_custom_call.1} parent=71 // pred_region
          %s1127 = sand.u32 %s261, 1
          %s1128 = scalar_lea.sflag [#allocation9], %s1127
          %s1129 = sand.u32 %s261, 1
          %s1130 = smul.addr %s1129, 4
          %s1131 = scalar_lea.vmem [#allocation8], %s1130
          %1132 = dma.done %s1128, 64
        $region80: #{tpu_custom_call.1} parent=71 // pred_fallthru
          _
      $region72: #{tpu_custom_call.1} parent=5 // pred_fallthru
        _
    $region6: #{tpu_custom_call.1} parent=1 // loop_footer
      %s32 = sadd.s32 1, %s28
    $region7: #{tpu_custom_call.1} parent=1 // loop_footer_branch
      %27 = sbr.rel target = $region3
    $region8: #{tpu_custom_call.1} parent=1 // loop_exit
      _
    %1133 = vsyncpa [#allocation3], 1
    %s1134 = scalar_lea.sflag [#allocation3], 1
    %1135 = vsyncpa %s1134, 1
    %1136 = vsyncpa [#allocation6], 1
    %s1137 = scalar_lea.sflag [#allocation6], 1
    %1138 = vsyncpa %s1137, 1
    %1139 = vsyncpa [#allocation4], 1
    %s1140 = scalar_lea.sflag [#allocation4], 1
    %1141 = vsyncpa %s1140, 1
    %1142 = vsyncpa [#allocation9], 1
    %s1143 = scalar_lea.sflag [#allocation9], 1
    %1144 = vsyncpa %s1143, 1

</llo_original>
